<compile_context>
chip_gen: v6e
topology: v6e:2x2x1
jax: 0.10.0
libtpu: 0.0.40
codegen_flags: <defaults>
</compile_context>

<pallas_src>
import math

import jax
import jax.numpy as jnp
from jax import lax
from jax.experimental import pallas as pl
from jax.experimental.pallas import tpu as pltpu


# ---------------------------------------------------------------------------
# Path A: dense-weight VPU kernel (small Cin/Cout).
#   a:   (B, Cin, M)      real/imag of the retained Fourier modes (M lanes)
#   w:   (Cin, Cout, M)   dense real/imag weight planes (no block-diag zeros)
#   out: (B, Cout, M)     out[b,o,m] = sum_i a[b,i,m] * w[i,o,m]   (complex)
# ---------------------------------------------------------------------------
def _make_vpu_kernel(has_film):
    def kernel(*refs):
        if has_film:
            ar_ref, ai_ref, wr_ref, wi_ref, f_ref, or_ref, oi_ref = refs
        else:
            ar_ref, ai_ref, wr_ref, wi_ref, or_ref, oi_ref = refs
        ar = ar_ref[...][:, :, None, :]           # (B, Cin, 1, M)
        ai = ai_ref[...][:, :, None, :]
        wr = wr_ref[...][None, :, :, :]           # (1, Cin, Cout, M)
        wi = wi_ref[...][None, :, :, :]
        # Complex product; the Cin reduction is over an outer dim -> pure
        # vreg adds on the VPU, no MXU / no streamed zero padding.
        o_r = jnp.sum(ar * wr - ai * wi, axis=1)  # (B, Cout, M)
        o_i = jnp.sum(ar * wi + ai * wr, axis=1)
        if has_film:
            f = f_ref[...]                        # (B, Cout, M) f32
            o_r = o_r * f
            o_i = o_i * f
        or_ref[...] = o_r
        oi_ref[...] = o_i
    return kernel


def _vpu_spectral_mul(ar, ai, wr, wi, film=None):
    B, _, M = ar.shape
    Cout = wr.shape[1]
    args = (ar, ai, wr, wi) + (() if film is None else (film,))
    # Whole-array blocks, single invocation: at these sizes everything fits
    # VMEM comfortably and there is no grid-step overhead at all.
    return pl.pallas_call(
        _make_vpu_kernel(film is not None),
        out_shape=(jax.ShapeDtypeStruct((B, Cout, M), jnp.float32),
                   jax.ShapeDtypeStruct((B, Cout, M), jnp.float32)),
    )(*args)


# ---------------------------------------------------------------------------
# Path B: block-diagonal MXU kernel (large Cin/Cout).
#   a:   (G, B, TM*Cin)        packed modes (lane-dense, K >= 128)
#   w:   (G, TM*Cin, TM*Cout)  block-diagonal real/imag planes (bf16 default)
#   out: (G, B, TM*Cout)       f32
# Several groups are processed per grid step (unrolled loop) to amortize the
# per-step overhead and make the weight DMAs bandwidth-efficient.
# ---------------------------------------------------------------------------
def _make_mxu_kernel(groups_per_step, has_film):
    def kernel(*refs):
        if has_film:
            ar_ref, ai_ref, wr_ref, wi_ref, f_ref, or_ref, oi_ref = refs
        else:
            ar_ref, ai_ref, wr_ref, wi_ref, or_ref, oi_ref = refs

        def body(g, carry):
            ar = ar_ref[g]                        # (B, TM*Cin)
            ai = ai_ref[g]
            wr = wr_ref[g]                        # (TM*Cin, TM*Cout)
            wi = wi_ref[g]
            # Direct 4-matmul complex product: only 2 streamed weight planes,
            # f32 accumulation on the MXU, no cancellation-prone combination.
            rr = jnp.dot(ar, wr, preferred_element_type=jnp.float32)
            ii = jnp.dot(ai, wi, preferred_element_type=jnp.float32)
            ri = jnp.dot(ar, wi, preferred_element_type=jnp.float32)
            ir = jnp.dot(ai, wr, preferred_element_type=jnp.float32)
            o_r = rr - ii
            o_i = ri + ir
            if has_film:
                f = f_ref[g]                      # (B, TM*Cout) f32
                o_r = o_r * f
                o_i = o_i * f
            or_ref[g] = o_r
            oi_ref[g] = o_i
            return carry

        lax.fori_loop(0, groups_per_step, body, 0, unroll=True)
    return kernel


def _mxu_spectral_mul(ar, ai, wr_bd, wi_bd, film=None, *, groups_per_step):
    G, B, K = ar.shape
    N = wr_bd.shape[2]
    gb = groups_per_step
    steps = G // gb
    a_spec = pl.BlockSpec((gb, B, K), lambda s: (s, 0, 0))
    w_spec = pl.BlockSpec((gb, K, N), lambda s: (s, 0, 0))
    o_spec = pl.BlockSpec((gb, B, N), lambda s: (s, 0, 0))
    in_specs = [a_spec, a_spec, w_spec, w_spec]
    args = [ar, ai, wr_bd, wi_bd]
    if film is not None:
        in_specs.append(o_spec)
        args.append(film)
    # NOTE: pipeline_mode=pl.Buffered(3) on w_spec only helps once blocks are
    # MiB-scale and the startup DMA is still exposed; default depth kept here.
    return pl.pallas_call(
        _make_mxu_kernel(gb, film is not None),
        out_shape=(jax.ShapeDtypeStruct((G, B, N), jnp.float32),
                   jax.ShapeDtypeStruct((G, B, N), jnp.float32)),
        grid=(steps,),
        in_specs=in_specs,
        out_specs=(o_spec, o_spec),
        compiler_params=pltpu.CompilerParams(
            dimension_semantics=("arbitrary",)),
    )(*args)


# ---------------------------------------------------------------------------
# Tiling helpers (MXU path).
# ---------------------------------------------------------------------------
def _pick_mode_tile(m_total, c_in, c_out, lane=128):
    """Smallest divisor TM of m_total giving lane-dense MXU blocks.

    Prefers TM*Cout an exact multiple of 128 (unmasked vst); keeps TM minimal
    so the block-diagonal zero padding (i.e. streamed weight bytes) stays
    minimal -- do NOT inflate TM to fill the 256-wide v6e/v7x MXU."""
    for tm in range(1, m_total + 1):
        if m_total % tm == 0 and tm * c_in >= lane and (tm * c_out) % lane == 0:
            return tm
    for tm in range(1, m_total + 1):
        if m_total % tm == 0 and tm * c_in >= lane and tm * c_out >= lane:
            return tm
    return m_total


def _pick_groups_per_step(num_groups, k_dim, n_dim, itemsize,
                          weight_block_budget=2 << 20):
    """Largest divisor of num_groups with a per-step weight block (2 planes)
    under ~2 MiB: amortizes the ~0.35us grid-step overhead while keeping the
    double-buffered working set far below v7x's 64 MiB VMEM."""
    per_group = 2 * k_dim * n_dim * itemsize
    gb = 1
    for d in range(1, num_groups + 1):
        if num_groups % d == 0 and d * per_group <= weight_block_budget:
            gb = d
    return gb


# ---------------------------------------------------------------------------
# Module (parameters initialized deterministically in-script)
# ---------------------------------------------------------------------------
class SpectralConv2d:
    def __init__(self, in_channels, out_channels, modes, feature_transform=False,
                 feature_transform_dim=6, transform_mode=1, key=None,
                 mxu_plane_dtype=jnp.bfloat16):
        self.in_channels = in_channels
        self.out_channels = out_channels
        self.modes1, self.modes2 = modes
        self.feature_transform = feature_transform
        self.feature_transform_dim = feature_transform_dim
        self.transform_mode = transform_mode

        key = jax.random.PRNGKey(0) if key is None else key
        k1, k2, k3, k4, k5, k6 = jax.random.split(key, 6)
        scale = 1.0 / (in_channels * out_channels)
        wshape = (in_channels, out_channels, self.modes1, self.modes2)
        # torch.rand(..., dtype=torch.cfloat): uniform [0,1) real and imag.
        self.weights1 = (scale * lax.complex(
            jax.random.uniform(k1, wshape, jnp.float32),
            jax.random.uniform(k2, wshape, jnp.float32))).astype(jnp.complex64)
        self.weights2 = (scale * lax.complex(
            jax.random.uniform(k3, wshape, jnp.float32),
            jax.random.uniform(k4, wshape, jnp.float32))).astype(jnp.complex64)

        if feature_transform:
            out_dim = out_channels * 2 * self.modes1 * self.modes2
            bound = 1.0 / math.sqrt(feature_transform_dim)
            # nn.Linear default init: U(-bound, bound) for weight and bias.
            self.wf = jax.random.uniform(
                k5, (feature_transform_dim, out_dim), jnp.float32, -bound, bound)
            self.bf = jax.random.uniform(
                k6, (out_dim,), jnp.float32, -bound, bound)

        # -------------------------------------------------------------------
        # Weight planes, precomputed ONCE (weights are constants).  Mode axis
        # = spectrum rows [0:m1] followed by rows [H-m1:H], flattened with m2
        # minor -- identical ordering on the activation, weight, FiLM and
        # output side, so the small-channel path needs NO transposes at all.
        # -------------------------------------------------------------------
        m1, m2 = self.modes1, self.modes2
        m_total = 2 * m1 * m2
        self.m_total = m_total
        w_all = jnp.concatenate([self.weights1, self.weights2], axis=2
                                ).reshape(in_channels, out_channels, m_total)

        # Small channel counts -> dense VPU path (no block-diagonal zeros).
        self.use_mxu = max(in_channels, out_channels) > 16
        if not self.use_mxu:
            self.wr_dense = jnp.real(w_all).astype(jnp.float32)   # (Cin,Cout,M)
            self.wi_dense = jnp.imag(w_all).astype(jnp.float32)
            return

        # Large channel counts -> block-diagonal MXU path, 2 planes (Wr, Wi),
        # bf16 planes by default (f32 accumulate on the MXU).
        self.plane_dtype = mxu_plane_dtype
        tm = _pick_mode_tile(m_total, in_channels, out_channels)
        g = m_total // tm
        self.mode_tile, self.num_groups = tm, g
        k_dim, n_dim = tm * in_channels, tm * out_channels
        # (n_dim % 128 != 0 would only cause masked partial stores -- a perf,
        #  not correctness, issue.)
        w_mode = jnp.transpose(w_all, (2, 0, 1)).reshape(
            g, tm, in_channels, out_channels)                     # (G,TM,Cin,Cout)
        eye = jnp.eye(tm, dtype=jnp.float32)
        wr = jnp.einsum('gtio,ts->gtiso',
                        jnp.real(w_mode).astype(jnp.float32), eye
                        ).reshape(g, k_dim, n_dim)
        wi = jnp.einsum('gtio,ts->gtiso',
                        jnp.imag(w_mode).astype(jnp.float32), eye
                        ).reshape(g, k_dim, n_dim)
        self.wr_bd = wr.astype(self.plane_dtype)
        self.wi_bd = wi.astype(self.plane_dtype)
        self.groups_per_step = _pick_groups_per_step(
            g, k_dim, n_dim, jnp.dtype(self.plane_dtype).itemsize)

    # ---- MXU-path packing helpers (operate on the small mode slab only) ----
    def _pack_mxu(self, arr_bcm):
        """(B, C, M) -> (G, B, TM*C)  (mode-major, channel-minor lanes)."""
        B, c, _ = arr_bcm.shape
        a = jnp.transpose(arr_bcm, (0, 2, 1)).reshape(
            B, self.num_groups, self.mode_tile * c)
        return jnp.transpose(a, (1, 0, 2))

    def _unpack_mxu(self, arr_gbn, c_out):
        """(G, B, TM*Cout) -> (B, Cout, M)."""
        _, B, _ = arr_gbn.shape
        a = jnp.transpose(arr_gbn, (1, 0, 2)).reshape(B, self.m_total, c_out)
        return jnp.transpose(a, (0, 2, 1))

    def __call__(self, x, p=None):
        B, Cin, H, W = x.shape
        m1, m2 = self.modes1, self.modes2
        Cout = self.out_channels
        Wf = W // 2 + 1
        M = self.m_total

        # TODO(synk): rfft2/irfft2 run in XLA (no Pallas FFT primitive on TPU).
        x_ft = jnp.fft.rfft2(x)                                  # (B,Cin,H,Wf) c64
        modes_c = jnp.concatenate(
            [x_ft[:, :, :m1, :m2], x_ft[:, :, H - m1:, :m2]], axis=2
        ).reshape(B, Cin, M)                                     # (B,Cin,M) c64

        # FiLM scale over the retained modes (kept f32; fused into the kernel).
        film = None
        if self.feature_transform:
            assert p is not None
            film_w = (p @ self.wf + self.bf).reshape(B, Cout, M)
            if self.transform_mode == 0:
                film = 1.0 + film_w
            elif self.transform_mode == 1:
                film = film_w
            # else: FiLM stays all-ones (identity) -- matches the PyTorch module.

        if self.use_mxu:
            ar = self._pack_mxu(jnp.real(modes_c)).astype(self.plane_dtype)
            ai = self._pack_mxu(jnp.imag(modes_c)).astype(self.plane_dtype)
            film_p = None if film is None else \
                self._pack_mxu(film).astype(jnp.float32)
            out_r, out_i = _mxu_spectral_mul(
                ar, ai, self.wr_bd, self.wi_bd, film_p,
                groups_per_step=self.groups_per_step)
            out_r = self._unpack_mxu(out_r, Cout)
            out_i = self._unpack_mxu(out_i, Cout)
        else:
            ar = jnp.real(modes_c).astype(jnp.float32)
            ai = jnp.imag(modes_c).astype(jnp.float32)
            out_r, out_i = _vpu_spectral_mul(
                ar, ai, self.wr_dense, self.wi_dense, film)

        # (B, Cout, M) -> (B, Cout, 2*m1, m2); scatter into the full spectrum
        # with two dynamic_update_slices and inverse-FFT back to real space.
        out = lax.complex(out_r, out_i).reshape(B, Cout, 2 * m1, m2)
        out_ft = jnp.zeros((B, Cout, H, Wf), dtype=jnp.complex64)
        out_ft = out_ft.at[:, :, :m1, :m2].set(out[:, :, :m1, :])
        out_ft = out_ft.at[:, :, H - m1:, :m2].set(out[:, :, m1:, :])
        return jnp.fft.irfft2(out_ft, s=(H, W))                  # (B,Cout,H,W) f32


# ---------------------------------------------------------------------------
# Pure-JAX reference (mirrors the PyTorch module) for correctness checking
# ---------------------------------------------------------------------------
def _ref_forward(layer, x, p=None):
    B, _, H, W = x.shape
    m1, m2 = layer.modes1, layer.modes2
    Wf = W // 2 + 1
    x_ft = jnp.fft.rfft2(x)
    low = jnp.einsum('bixy,ioxy->boxy', x_ft[:, :, :m1, :m2], layer.weights1)
    high = jnp.einsum('bixy,ioxy->boxy', x_ft[:, :, H - m1:, :m2], layer.weights2)
    out_ft = jnp.zeros((B, layer.out_channels, H, Wf), dtype=jnp.complex64)
    out_ft = out_ft.at[:, :, :m1, :m2].set(low)
    out_ft = out_ft.at[:, :, H - m1:, :m2].set(high)
    if layer.feature_transform:
        film_w = (p @ layer.wf + layer.bf).reshape(B, layer.out_channels,
                                                   2 * m1, m2)
        film = jnp.ones((B, layer.out_channels, H, Wf), dtype=jnp.float32)
        if layer.transform_mode == 0:
            film = film.at[:, :, :m1, :m2].add(film_w[:, :, :m1, :])
            film = film.at[:, :, H - m1:, :m2].add(film_w[:, :, m1:, :])
        elif layer.transform_mode == 1:
            film = film.at[:, :, :m1, :m2].set(film_w[:, :, :m1, :])
            film = film.at[:, :, H - m1:, :m2].set(film_w[:, :, m1:, :])
        # transform_mode >= 2: FiLM stays all ones (identity), as in PyTorch.
        out_ft = out_ft * film
    return jnp.fft.irfft2(out_ft, s=(H, W))


if __name__ == "__main__":
    key = jax.random.PRNGKey(0)
    kx, kp, kx2, kw1, kw2, kw3, kw4 = jax.random.split(key, 7)

    B, Cin, Cout, H, W = 2, 4, 4, 16, 16
    modes = (4, 4)
    x = jax.random.normal(kx, (B, Cin, H, W), dtype=jnp.float32)
    p = jax.random.normal(kp, (B, 6), dtype=jnp.float32)

    # 1) Small channel count -> dense VPU path (f32), strict check.
    layer = SpectralConv2d(Cin, Cout, modes, key=kw1)
    y = jax.block_until_ready(layer(x))
    y_ref = _ref_forward(layer, x)
    assert y.shape == (B, Cout, H, W) and y.dtype == jnp.float32
    assert float(jnp.max(jnp.abs(y - y_ref))) < 1e-4

    # 2) Small channel count + FiLM (transform_mode=1), fused into the kernel.
    layer_ft = SpectralConv2d(Cin, Cout, modes, feature_transform=True,
                              feature_transform_dim=6, transform_mode=1, key=kw2)
    y_ft = jax.block_until_ready(layer_ft(x, p))
    assert float(jnp.max(jnp.abs(y_ft - _ref_forward(layer_ft, x, p)))) < 1e-4

    # 3) Large channel count -> block-diag MXU path (f32 planes) + FiLM, strict.
    C = 32
    x32 = jax.random.normal(kx2, (B, C, H, W), dtype=jnp.float32)
    layer_mxu = SpectralConv2d(C, C, modes, feature_transform=True,
                               feature_transform_dim=6, transform_mode=1,
                               key=kw3, mxu_plane_dtype=jnp.float32)
    y32 = jax.block_until_ready(layer_mxu(x32, p))
    assert float(jnp.max(jnp.abs(y32 - _ref_forward(layer_mxu, x32, p)))) < 1e-4

    # 4) Large channel count, default bf16 weight planes (production setting):
    #    check against the f32 reference with a bf16-appropriate tolerance.
    layer_bf16 = SpectralConv2d(C, C, modes, key=kw4)
    y_bf = jax.block_until_ready(layer_bf16(x32))
    y_bf_ref = _ref_forward(layer_bf16, x32)
    err = float(jnp.max(jnp.abs(y_bf - y_bf_ref)))
    ref_scale = float(jnp.max(jnp.abs(y_bf_ref)))
    assert err < 5e-2 * ref_scale + 1e-5

    print("KERNEL_OK")
</pallas_src>

<mosaic_0001>
module attributes {stable_mosaic.version = 11 : i64} {
  func.func @kernel(%arg0: memref<2x4x32xf32, #tpu.memory_space<vmem>>, %arg1: memref<2x4x32xf32, #tpu.memory_space<vmem>>, %arg2: memref<4x4x32xf32, #tpu.memory_space<vmem>>, %arg3: memref<4x4x32xf32, #tpu.memory_space<vmem>>, %arg4: memref<2x4x32xf32, #tpu.memory_space<vmem>>, %arg5: memref<2x4x32xf32, #tpu.memory_space<vmem>>) attributes {dimension_semantics = [], scalar_prefetch = 0 : i64, scratch_operands = 0 : i64, tpu.core_type = #tpu.core_type<tc>} {
    %c0 = arith.constant 0 : index
    %c0_0 = arith.constant 0 : index
    %c0_1 = arith.constant 0 : index
    %0 = vector.load %arg0[%c0, %c0_0, %c0_1] : memref<2x4x32xf32, #tpu.memory_space<vmem>>, vector<2x4x32xf32>
    %1 = vector.shape_cast %0 : vector<2x4x32xf32> to vector<2x4x1x32xf32>
    %c0_2 = arith.constant 0 : index
    %c0_3 = arith.constant 0 : index
    %c0_4 = arith.constant 0 : index
    %2 = vector.load %arg1[%c0_2, %c0_3, %c0_4] : memref<2x4x32xf32, #tpu.memory_space<vmem>>, vector<2x4x32xf32>
    %3 = vector.shape_cast %2 : vector<2x4x32xf32> to vector<2x4x1x32xf32>
    %c0_5 = arith.constant 0 : index
    %c0_6 = arith.constant 0 : index
    %c0_7 = arith.constant 0 : index
    %4 = vector.load %arg2[%c0_5, %c0_6, %c0_7] : memref<4x4x32xf32, #tpu.memory_space<vmem>>, vector<4x4x32xf32>
    %5 = vector.shape_cast %4 : vector<4x4x32xf32> to vector<1x4x4x32xf32>
    %c0_8 = arith.constant 0 : index
    %c0_9 = arith.constant 0 : index
    %c0_10 = arith.constant 0 : index
    %6 = vector.load %arg3[%c0_8, %c0_9, %c0_10] : memref<4x4x32xf32, #tpu.memory_space<vmem>>, vector<4x4x32xf32>
    %7 = vector.shape_cast %6 : vector<4x4x32xf32> to vector<1x4x4x32xf32>
    %8 = vector.broadcast %1 : vector<2x4x1x32xf32> to vector<2x4x4x32xf32>
    %9 = vector.broadcast %5 : vector<1x4x4x32xf32> to vector<2x4x4x32xf32>
    %10 = arith.mulf %8, %9 : vector<2x4x4x32xf32>
    %11 = vector.broadcast %3 : vector<2x4x1x32xf32> to vector<2x4x4x32xf32>
    %12 = vector.broadcast %7 : vector<1x4x4x32xf32> to vector<2x4x4x32xf32>
    %13 = arith.mulf %11, %12 : vector<2x4x4x32xf32>
    %14 = arith.subf %10, %13 : vector<2x4x4x32xf32>
    %cst = arith.constant dense<0.000000e+00> : vector<2x4x32xf32>
    %15 = vector.multi_reduction <add>, %14, %cst [1] : vector<2x4x4x32xf32> to vector<2x4x32xf32>
    %16 = vector.broadcast %1 : vector<2x4x1x32xf32> to vector<2x4x4x32xf32>
    %17 = vector.broadcast %7 : vector<1x4x4x32xf32> to vector<2x4x4x32xf32>
    %18 = arith.mulf %16, %17 : vector<2x4x4x32xf32>
    %19 = vector.broadcast %3 : vector<2x4x1x32xf32> to vector<2x4x4x32xf32>
    %20 = vector.broadcast %5 : vector<1x4x4x32xf32> to vector<2x4x4x32xf32>
    %21 = arith.mulf %19, %20 : vector<2x4x4x32xf32>
    %22 = arith.addf %18, %21 : vector<2x4x4x32xf32>
    %cst_11 = arith.constant dense<0.000000e+00> : vector<2x4x32xf32>
    %23 = vector.multi_reduction <add>, %22, %cst_11 [1] : vector<2x4x4x32xf32> to vector<2x4x32xf32>
    %c0_12 = arith.constant 0 : index
    %c0_13 = arith.constant 0 : index
    %c0_14 = arith.constant 0 : index
    %24 = vector.load %arg4[%c0_12, %c0_13, %c0_14] : memref<2x4x32xf32, #tpu.memory_space<vmem>>, vector<2x4x32xf32>
    tpu.vector_store %arg4[%c0_12, %c0_13, %c0_14], %15 {strides = array<i32>} : memref<2x4x32xf32, #tpu.memory_space<vmem>>, vector<2x4x32xf32>,
    %c0_15 = arith.constant 0 : index
    %c0_16 = arith.constant 0 : index
    %c0_17 = arith.constant 0 : index
    %25 = vector.load %arg5[%c0_15, %c0_16, %c0_17] : memref<2x4x32xf32, #tpu.memory_space<vmem>>, vector<2x4x32xf32>
    tpu.vector_store %arg5[%c0_15, %c0_16, %c0_17], %23 {strides = array<i32>} : memref<2x4x32xf32, #tpu.memory_space<vmem>>, vector<2x4x32xf32>,
    return
  }
}

</mosaic_0001>

<llo_original>
// kernel: tpu_custom_call.1
$region0: #{tpu_custom_call.1}
  #allocation0 [shape = 'u32[]', space=smem, size = 0x4, offset = 0x4, fixed_abs, tag = 'smem constant byte address 0x4 - core index']
  #allocation1 [shape = 'u32[144,128]{1,0:T(1,128)}', space=vmem, size = 0x12000, scoped, tag = 'internal scratch']
  %s0 = inlined_call_operand.hbm [shape: f32[2,4,32], index: 0, kind: input, shape index: {}]
  %s1 = inlined_call_operand.hbm [shape: f32[2,4,32], index: 1, kind: input, shape index: {}]
  %s2 = inlined_call_operand.hbm [shape: f32[4,4,32], index: 2, kind: input, shape index: {}]
  %s3 = inlined_call_operand.hbm [shape: f32[4,4,32], index: 3, kind: input, shape index: {}]
  %s4 = inlined_call_operand.hbm [shape: f32[2,4,32], index: 4, kind: output, shape index: {0}]
  %s5 = inlined_call_operand.hbm [shape: f32[2,4,32], index: 5, kind: output, shape index: {1}]
  %6 = xla_tuple %s4, %s5
  %s7 = sld [smem:[#allocation0]]
  $region50: #{tpu_custom_call.1} parent=0
    _
  %s9 = ssub.s32 1, %s7
  %s10 = scalar_select 0, %s9, %s7
  $region1: #{tpu_custom_call.1} parent=0
    #allocation2 [shape = 'u8[4096]{0}', space=vmem, size = 0x1000, scoped, tag = 'input window, operand 0, single buffered']
    #allocation3 [shape = 's32[1]{0}', space=sflag, size = 0x4, scoped, tag = 'scoped memory for tpu_custom_call.1']
    #allocation4 [shape = 's32[1]{0}', space=sflag, size = 0x4, scoped, tag = 'scoped memory for tpu_custom_call.1']
    #allocation5 [shape = 'u8[4096]{0}', space=vmem, size = 0x1000, scoped, tag = 'input window, operand 1, single buffered']
    #allocation6 [shape = 's32[1]{0}', space=sflag, size = 0x4, scoped, tag = 'scoped memory for tpu_custom_call.1']
    #allocation7 [shape = 'u8[8192]{0}', space=vmem, size = 0x2000, scoped, tag = 'input window, operand 2, single buffered']
    #allocation8 [shape = 'u8[8192]{0}', space=vmem, size = 0x2000, scoped, tag = 'input window, operand 3, single buffered']
    #allocation9 [shape = 's32[1]{0}', space=sflag, size = 0x4, scoped, tag = 'scoped memory for tpu_custom_call.1']
    #allocation10 [shape = 'u8[4096]{0}', space=vmem, size = 0x1000, scoped, tag = 'output window, operand 0, single buffered']
    #allocation11 [shape = 'u8[4096]{0}', space=vmem, size = 0x1000, scoped, tag = 'output window, operand 1, single buffered']
    #allocation12 [shape = 's32[1]{0}', space=sflag, size = 0x4, scoped, tag = 'scoped memory for tpu_custom_call.1']
    %11 = vsyncpa [#allocation3], 0
    %12 = vsyncpa [#allocation6], 0
    %13 = vsyncpa [#allocation9], 0
    %14 = vsyncpa [#allocation4], 0
    %15 = vsyncpa [#allocation12], 0
    // Predicated region
    $region2: #{tpu_custom_call.1} parent=1 // pred_check
      _
    $region3: #{tpu_custom_call.1} parent=1 // pred_check_branch
      %17 = sbr.rel (0) target = $region5
    $region4: #{tpu_custom_call.1} parent=1 // pred_region
      %s19 = ssub.s32 128, 128
      %20 = vsyncadd [#allocation3], %s19
      %s21 = sshll.u32 [#allocation2], 4
      %s22 = int_to_ptr.vmem [resolvable:$true] %s21
      %27 = dma.hbm_to_vmem [thread:$0]  %s0, 128, %s22, [#allocation3], 64, 64, 4
    $region5: #{tpu_custom_call.1} parent=1 // pred_fallthru
      _
    // Predicated region
    $region6: #{tpu_custom_call.1} parent=1 // pred_check
      _
    $region7: #{tpu_custom_call.1} parent=1 // pred_check_branch
      %29 = sbr.rel (0) target = $region9
    $region8: #{tpu_custom_call.1} parent=1 // pred_region
      %s31 = ssub.s32 128, 128
      %32 = vsyncadd [#allocation6], %s31
      %s33 = sshll.u32 [#allocation5], 4
      %s34 = int_to_ptr.vmem [resolvable:$true] %s33
      %39 = dma.hbm_to_vmem [thread:$0]  %s1, 128, %s34, [#allocation6], 64, 64, 4
    $region9: #{tpu_custom_call.1} parent=1 // pred_fallthru
      _
    // Predicated region
    $region10: #{tpu_custom_call.1} parent=1 // pred_check
      _
    $region11: #{tpu_custom_call.1} parent=1 // pred_check_branch
      %41 = sbr.rel (0) target = $region13
    $region12: #{tpu_custom_call.1} parent=1 // pred_region
      %s43 = ssub.s32 256, 256
      %44 = vsyncadd [#allocation6], %s43
      %s45 = sshll.u32 [#allocation7], 4
      %s46 = int_to_ptr.vmem [resolvable:$true] %s45
      %51 = dma.hbm_to_vmem [thread:$0]  %s2, 256, %s46, [#allocation6], 64, 64, 4
    $region13: #{tpu_custom_call.1} parent=1 // pred_fallthru
      _
    // Predicated region
    $region14: #{tpu_custom_call.1} parent=1 // pred_check
      _
    $region15: #{tpu_custom_call.1} parent=1 // pred_check_branch
      %53 = sbr.rel (0) target = $region17
    $region16: #{tpu_custom_call.1} parent=1 // pred_region
      %s55 = ssub.s32 256, 256
      %56 = vsyncadd [#allocation9], %s55
      %s57 = sshll.u32 [#allocation8], 4
      %s58 = int_to_ptr.vmem [resolvable:$true] %s57
      %63 = dma.hbm_to_vmem [thread:$0]  %s3, 256, %s58, [#allocation9], 64, 64, 4
    $region17: #{tpu_custom_call.1} parent=1 // pred_fallthru
      _
    // Predicated region
    $region18: #{tpu_custom_call.1} parent=1 // pred_check
      _
    $region19: #{tpu_custom_call.1} parent=1 // pred_check_branch
      %65 = sbr.rel (0) target = $region21
    $region20: #{tpu_custom_call.1} parent=1 // pred_region
      %66 = dma.done [#allocation3], 128
    $region21: #{tpu_custom_call.1} parent=1 // pred_fallthru
      _
    // Predicated region
    $region22: #{tpu_custom_call.1} parent=1 // pred_check
      _
    $region23: #{tpu_custom_call.1} parent=1 // pred_check_branch
      %68 = sbr.rel (0) target = $region25
    $region24: #{tpu_custom_call.1} parent=1 // pred_region
      %69 = dma.done [#allocation6], 128
    $region25: #{tpu_custom_call.1} parent=1 // pred_fallthru
      _
    // Predicated region
    $region26: #{tpu_custom_call.1} parent=1 // pred_check
      _
    $region27: #{tpu_custom_call.1} parent=1 // pred_check_branch
      %71 = sbr.rel (0) target = $region29
    $region28: #{tpu_custom_call.1} parent=1 // pred_region
      %72 = dma.done [#allocation6], 256
    $region29: #{tpu_custom_call.1} parent=1 // pred_fallthru
      _
    // Predicated region
    $region30: #{tpu_custom_call.1} parent=1 // pred_check
      _
    $region31: #{tpu_custom_call.1} parent=1 // pred_check_branch
      %74 = sbr.rel (0) target = $region33
    $region32: #{tpu_custom_call.1} parent=1 // pred_region
      %75 = dma.done [#allocation9], 256
    $region33: #{tpu_custom_call.1} parent=1 // pred_fallthru
      _
    %v76 = vld [vmem:[#allocation2] sm:$0xf]
    %v77 = vld [vmem:[#allocation2 + $0x4] sm:$0xf]
    %v81 = vunpack.c.l.s4 1966171168
    %v82 = vunpack.c.0.s8 %v81
    %v83 = vlaneseq
    %v84 = vshrl.u32 %v83, 7
    %v85 = vsub.s32 %v82, %v84
    %v86 = vrot.slane %v76, %v85
    %v87 = vcombine.high %v86, %v86
    %v89 = vunpack.c.l.s4 1966171168
    %v90 = vunpack.c.0.s8 %v89
    %v91 = vlaneseq
    %v92 = vshrl.u32 %v91, 7
    %v93 = vsub.s32 %v90, %v92
    %v94 = vrot.slane %v86, %v93
    %v96 = vunpack.c.l.s4 1966171168
    %v97 = vunpack.c.0.s8 %v96
    %v98 = vlaneseq
    %v99 = vshrl.u32 %v98, 7
    %v100 = vsub.s32 %v97, %v99
    %v101 = vrot.slane %v87, %v100
    %v102 = vcombine.high %v94, %v94
    %v103 = vcombine.high %v101, %v101
    %v105 = vunpack.c.l.s4 1966171168
    %v106 = vunpack.c.0.s8 %v105
    %v107 = vlaneseq
    %v108 = vshrl.u32 %v107, 7
    %v109 = vsub.s32 %v106, %v108
    %v110 = vrot.slane %v77, %v109
    %v111 = vcombine.high %v110, %v110
    %v113 = vunpack.c.l.s4 1966171168
    %v114 = vunpack.c.0.s8 %v113
    %v115 = vlaneseq
    %v116 = vshrl.u32 %v115, 7
    %v117 = vsub.s32 %v114, %v116
    %v118 = vrot.slane %v110, %v117
    %v120 = vunpack.c.l.s4 1966171168
    %v121 = vunpack.c.0.s8 %v120
    %v122 = vlaneseq
    %v123 = vshrl.u32 %v122, 7
    %v124 = vsub.s32 %v121, %v123
    %v125 = vrot.slane %v111, %v124
    %v126 = vcombine.high %v118, %v118
    %v127 = vcombine.high %v125, %v125
    %v128 = vld [vmem:[#allocation5] sm:$0xf]
    %v129 = vld [vmem:[#allocation5 + $0x4] sm:$0xf]
    %v133 = vunpack.c.l.s4 1966171168
    %v134 = vunpack.c.0.s8 %v133
    %v135 = vlaneseq
    %v136 = vshrl.u32 %v135, 7
    %v137 = vsub.s32 %v134, %v136
    %v138 = vrot.slane %v128, %v137
    %v139 = vcombine.high %v138, %v138
    %v141 = vunpack.c.l.s4 1966171168
    %v142 = vunpack.c.0.s8 %v141
    %v143 = vlaneseq
    %v144 = vshrl.u32 %v143, 7
    %v145 = vsub.s32 %v142, %v144
    %v146 = vrot.slane %v138, %v145
    %v148 = vunpack.c.l.s4 1966171168
    %v149 = vunpack.c.0.s8 %v148
    %v150 = vlaneseq
    %v151 = vshrl.u32 %v150, 7
    %v152 = vsub.s32 %v149, %v151
    %v153 = vrot.slane %v139, %v152
    %v154 = vcombine.high %v146, %v146
    %v155 = vcombine.high %v153, %v153
    %v157 = vunpack.c.l.s4 1966171168
    %v158 = vunpack.c.0.s8 %v157
    %v159 = vlaneseq
    %v160 = vshrl.u32 %v159, 7
    %v161 = vsub.s32 %v158, %v160
    %v162 = vrot.slane %v129, %v161
    %v163 = vcombine.high %v162, %v162
    %v165 = vunpack.c.l.s4 1966171168
    %v166 = vunpack.c.0.s8 %v165
    %v167 = vlaneseq
    %v168 = vshrl.u32 %v167, 7
    %v169 = vsub.s32 %v166, %v168
    %v170 = vrot.slane %v162, %v169
    %v172 = vunpack.c.l.s4 1966171168
    %v173 = vunpack.c.0.s8 %v172
    %v174 = vlaneseq
    %v175 = vshrl.u32 %v174, 7
    %v176 = vsub.s32 %v173, %v175
    %v177 = vrot.slane %v163, %v176
    %v178 = vcombine.high %v170, %v170
    %v179 = vcombine.high %v177, %v177
    %v180 = vld [vmem:[#allocation7] sm:$0xf]
    %v181 = vld [vmem:[#allocation7 + $0x4] sm:$0xf]
    %v182 = vld [vmem:[#allocation7 + $0x8] sm:$0xf]
    %v183 = vld [vmem:[#allocation7 + $0xc] sm:$0xf]
    %v184 = vld [vmem:[#allocation8] sm:$0xf]
    %v185 = vld [vmem:[#allocation8 + $0x4] sm:$0xf]
    %v186 = vld [vmem:[#allocation8 + $0x8] sm:$0xf]
    %v187 = vld [vmem:[#allocation8 + $0xc] sm:$0xf]
    %v188 = vlaneseq
    %v189 = vshrl.u32 %v188, 7
    %v190 = vsub.s32 0, %v189
    %v191 = vrot.slane %v94, %v190
    %v192 = vlaneseq
    %v193 = vshrl.u32 %v192, 7
    %v194 = vsub.s32 0, %v193
    %v195 = vrot.slane %v101, %v194
    %v196 = vlaneseq
    %v197 = vshrl.u32 %v196, 7
    %v198 = vsub.s32 0, %v197
    %v199 = vrot.slane %v102, %v198
    %v200 = vlaneseq
    %v201 = vshrl.u32 %v200, 7
    %v202 = vsub.s32 0, %v201
    %v203 = vrot.slane %v103, %v202
    %v204 = vlaneseq
    %v205 = vshrl.u32 %v204, 7
    %v206 = vsub.s32 0, %v205
    %v207 = vrot.slane %v118, %v206
    %v208 = vlaneseq
    %v209 = vshrl.u32 %v208, 7
    %v210 = vsub.s32 0, %v209
    %v211 = vrot.slane %v125, %v210
    %v212 = vlaneseq
    %v213 = vshrl.u32 %v212, 7
    %v214 = vsub.s32 0, %v213
    %v215 = vrot.slane %v126, %v214
    %v216 = vlaneseq
    %v217 = vshrl.u32 %v216, 7
    %v218 = vsub.s32 0, %v217
    %v219 = vrot.slane %v127, %v218
    %v228 = vmul.f32 %v191, %v180
    %v229 = vmul.f32 %v195, %v181
    %v230 = vmul.f32 %v199, %v182
    %v231 = vmul.f32 %v203, %v183
    %v232 = vmul.f32 %v207, %v180
    %v233 = vmul.f32 %v211, %v181
    %v234 = vmul.f32 %v215, %v182
    %v235 = vmul.f32 %v219, %v183
    %v236 = vlaneseq
    %v237 = vshrl.u32 %v236, 7
    %v238 = vsub.s32 0, %v237
    %v239 = vrot.slane %v146, %v238
    %v240 = vlaneseq
    %v241 = vshrl.u32 %v240, 7
    %v242 = vsub.s32 0, %v241
    %v243 = vrot.slane %v153, %v242
    %v244 = vlaneseq
    %v245 = vshrl.u32 %v244, 7
    %v246 = vsub.s32 0, %v245
    %v247 = vrot.slane %v154, %v246
    %v248 = vlaneseq
    %v249 = vshrl.u32 %v248, 7
    %v250 = vsub.s32 0, %v249
    %v251 = vrot.slane %v155, %v250
    %v252 = vlaneseq
    %v253 = vshrl.u32 %v252, 7
    %v254 = vsub.s32 0, %v253
    %v255 = vrot.slane %v170, %v254
    %v256 = vlaneseq
    %v257 = vshrl.u32 %v256, 7
    %v258 = vsub.s32 0, %v257
    %v259 = vrot.slane %v177, %v258
    %v260 = vlaneseq
    %v261 = vshrl.u32 %v260, 7
    %v262 = vsub.s32 0, %v261
    %v263 = vrot.slane %v178, %v262
    %v264 = vlaneseq
    %v265 = vshrl.u32 %v264, 7
    %v266 = vsub.s32 0, %v265
    %v267 = vrot.slane %v179, %v266
    %v276 = vmul.f32 %v239, %v184
    %v277 = vmul.f32 %v243, %v185
    %v278 = vmul.f32 %v247, %v186
    %v279 = vmul.f32 %v251, %v187
    %v280 = vmul.f32 %v255, %v184
    %v281 = vmul.f32 %v259, %v185
    %v282 = vmul.f32 %v263, %v186
    %v283 = vmul.f32 %v267, %v187
    %v284 = vsub.f32 %v228, %v276
    %v285 = vsub.f32 %v229, %v277
    %v286 = vsub.f32 %v230, %v278
    %v287 = vsub.f32 %v231, %v279
    %v288 = vsub.f32 %v232, %v280
    %v289 = vsub.f32 %v233, %v281
    %v290 = vsub.f32 %v234, %v282
    %v291 = vsub.f32 %v235, %v283
    %vm292 = vcmask 257024
    %v293 = vsel %vm292, %v284, 0.0
    %v294 = vsel %vm292, %v285, 0.0
    %v295 = vadd.f32 %v293, %v294
    %v296 = vsel %vm292, %v286, 0.0
    %v297 = vadd.f32 %v295, %v296
    %v298 = vsel %vm292, %v287, 0.0
    %v299 = vadd.f32 %v297, %v298
    %v300 = vsel %vm292, %v288, 0.0
    %v301 = vsel %vm292, %v289, 0.0
    %v302 = vadd.f32 %v300, %v301
    %v303 = vsel %vm292, %v290, 0.0
    %v304 = vadd.f32 %v302, %v303
    %v305 = vsel %vm292, %v291, 0.0
    %v306 = vadd.f32 %v304, %v305
    %v307 = vmul.f32 %v191, %v184
    %v308 = vmul.f32 %v195, %v185
    %v309 = vmul.f32 %v199, %v186
    %v310 = vmul.f32 %v203, %v187
    %v311 = vmul.f32 %v207, %v184
    %v312 = vmul.f32 %v211, %v185
    %v313 = vmul.f32 %v215, %v186
    %v314 = vmul.f32 %v219, %v187
    %v315 = vmul.f32 %v239, %v180
    %v316 = vmul.f32 %v243, %v181
    %v317 = vmul.f32 %v247, %v182
    %v318 = vmul.f32 %v251, %v183
    %v319 = vmul.f32 %v255, %v180
    %v320 = vmul.f32 %v259, %v181
    %v321 = vmul.f32 %v263, %v182
    %v322 = vmul.f32 %v267, %v183
    %v323 = vadd.f32 %v307, %v315
    %v324 = vadd.f32 %v308, %v316
    %v325 = vadd.f32 %v309, %v317
    %v326 = vadd.f32 %v310, %v318
    %v327 = vadd.f32 %v311, %v319
    %v328 = vadd.f32 %v312, %v320
    %v329 = vadd.f32 %v313, %v321
    %v330 = vadd.f32 %v314, %v322
    %v331 = vsel %vm292, %v323, 0.0
    %v332 = vsel %vm292, %v324, 0.0
    %v333 = vadd.f32 %v331, %v332
    %v334 = vsel %vm292, %v325, 0.0
    %v335 = vadd.f32 %v333, %v334
    %v336 = vsel %vm292, %v326, 0.0
    %v337 = vadd.f32 %v335, %v336
    %v338 = vsel %vm292, %v327, 0.0
    %v339 = vsel %vm292, %v328, 0.0
    %v340 = vadd.f32 %v338, %v339
    %v341 = vsel %vm292, %v329, 0.0
    %v342 = vadd.f32 %v340, %v341
    %v343 = vsel %vm292, %v330, 0.0
    %v344 = vadd.f32 %v342, %v343
    %345 = vst.msk [vmem:[#allocation10] sm:$0xf] %vm292, %v299
    %346 = vst.msk [vmem:[#allocation10 + $0x4] sm:$0xf] %vm292, %v306
    %347 = vst.msk [vmem:[#allocation11] sm:$0xf] %vm292, %v337
    %348 = vst.msk [vmem:[#allocation11 + $0x4] sm:$0xf] %vm292, %v344
    // Predicated region
    $region34: #{tpu_custom_call.1} parent=1 // pred_check
      _
    $region35: #{tpu_custom_call.1} parent=1 // pred_check_branch
      %350 = sbr.rel (0) target = $region37
    $region36: #{tpu_custom_call.1} parent=1 // pred_region
      %s352 = ssub.s32 128, 128
      %353 = vsyncadd [#allocation4], %s352
      %s354 = sshll.u32 [#allocation10], 4
      %s355 = int_to_ptr.vmem [resolvable:$true] %s354
      %360 = dma.vmem_to_hbm [thread:$0]  %s355, 128, %s4, [#allocation4], 64, 64, 4
    $region37: #{tpu_custom_call.1} parent=1 // pred_fallthru
      _
    // Predicated region
    $region38: #{tpu_custom_call.1} parent=1 // pred_check
      _
    $region39: #{tpu_custom_call.1} parent=1 // pred_check_branch
      %362 = sbr.rel (0) target = $region41
    $region40: #{tpu_custom_call.1} parent=1 // pred_region
      %s364 = ssub.s32 128, 128
      %365 = vsyncadd [#allocation12], %s364
      %s366 = sshll.u32 [#allocation11], 4
      %s367 = int_to_ptr.vmem [resolvable:$true] %s366
      %372 = dma.vmem_to_hbm [thread:$0]  %s367, 128, %s5, [#allocation12], 64, 64, 4
    $region41: #{tpu_custom_call.1} parent=1 // pred_fallthru
      _
    // Predicated region
    $region42: #{tpu_custom_call.1} parent=1 // pred_check
      _
    $region43: #{tpu_custom_call.1} parent=1 // pred_check_branch
      %374 = sbr.rel (0) target = $region45
    $region44: #{tpu_custom_call.1} parent=1 // pred_region
      %375 = dma.done [#allocation4], 128
    $region45: #{tpu_custom_call.1} parent=1 // pred_fallthru
      _
    // Predicated region
    $region46: #{tpu_custom_call.1} parent=1 // pred_check
      _
    $region47: #{tpu_custom_call.1} parent=1 // pred_check_branch
      %377 = sbr.rel (0) target = $region49
    $region48: #{tpu_custom_call.1} parent=1 // pred_region
      %378 = dma.done [#allocation12], 128
    $region49: #{tpu_custom_call.1} parent=1 // pred_fallthru
      _
    %379 = vsyncpa [#allocation3], 1
    %380 = vsyncpa [#allocation6], 1
    %381 = vsyncpa [#allocation9], 1
    %382 = vsyncpa [#allocation4], 1
    %383 = vsyncpa [#allocation12], 1

</llo_original>
